<compile_context>
chip_gen: v6e
topology: v6e:2x2x1
jax: 0.10.0
libtpu: 0.0.40
codegen_flags: <defaults>
</compile_context>

<pallas_src>
import functools

import jax
import jax.numpy as jnp
from jax.experimental import pallas as pl
from jax.experimental.pallas import tpu as pltpu


# Batches up to this size take the grid-free, fully VMEM-resident path.
# (On v5e/v6e this could be raised to a few thousand rows; kept at 512 so the
# tiled >=2-tile grid kicks in early enough to use both v7x TensorCores.)
_GRID_FREE_MAX_BATCH = 512
_MAX_TILE_M = 1024


# ----------------------------- Pallas kernel -------------------------------

def _fused_mlp_kernel(*refs, use_bf16=False):
    # refs = (x_ref, w0, b0, w1, b1, ..., w4, b4, o_ref)
    x_ref = refs[0]
    o_ref = refs[-1]
    wb_refs = refs[1:-1]

    h = x_ref[...]                                     # (tile_m, D_in) f32
    for i in range(0, len(wb_refs), 2):
        w = wb_refs[i][...]                            # (Din, Dout) f32 or bf16
        b = wb_refs[i + 1][...]                        # (1, Dout)   f32
        lhs = h.astype(jnp.bfloat16) if use_bf16 else h
        y = jnp.dot(lhs, w, preferred_element_type=jnp.float32)   # MXU, f32 acc
        h = jnp.maximum(y + b, 0.0)                    # f32 bias + ReLU epilogue
    o_ref[...] = h.astype(o_ref.dtype)


# ----------------------------- Helpers --------------------------------------

def _round_up(n, m):
    return ((n + m - 1) // m) * m


def _pad_to(a, shape):
    pads = [(0, t - s) for s, t in zip(a.shape, shape)]
    return jnp.pad(a, pads)


# ----------------------------- Param init / prepare -------------------------

def init_fc_encoder_params(key, n_features, embedding_size):
    layer_sizes = [
        n_features,
        embedding_size * 30,
        embedding_size * 20,
        embedding_size * 20,
        embedding_size * 10,
        embedding_size,
    ]
    params = []
    keys = jax.random.split(key, 6 * (len(layer_sizes) - 1))
    ki = 0
    for din, dout in zip(layer_sizes[:-1], layer_sizes[1:]):
        bound = 1.0 / jnp.sqrt(jnp.float32(din))
        w = jax.random.uniform(keys[ki], (din, dout), jnp.float32, -bound, bound); ki += 1
        b = jax.random.uniform(keys[ki], (1, dout), jnp.float32, -bound, bound); ki += 1
        gamma = 1.0 + 0.1 * jax.random.normal(keys[ki], (1, dout), jnp.float32); ki += 1
        beta = 0.1 * jax.random.normal(keys[ki], (1, dout), jnp.float32); ki += 1
        r_mean = 0.1 * jax.random.normal(keys[ki], (1, dout), jnp.float32); ki += 1
        r_var = 1.0 + 0.1 * jnp.abs(jax.random.normal(keys[ki], (1, dout), jnp.float32)); ki += 1
        params.append(dict(w=w, b=b, gamma=gamma, beta=beta,
                           running_mean=r_mean, running_var=r_var))
    return params


def prepare_params(params, eps=1e-5):
    """One-time: fold eval-mode BatchNorm into the Linears, zero-pad all hidden
    feature dims to multiples of 128 (layer-0 input dim is left unpadded), and
    pre-cast a bf16 copy of the weights.  Run once; pass the result to
    fc_encoder_forward on every call."""
    n_layers = len(params)
    dims_out = [p["w"].shape[1] for p in params]
    dims_out_pad = [_round_up(d, 128) for d in dims_out]

    wbs_f32, wbs_bf16 = [], []
    for li, p in enumerate(params):
        w, b = p["w"], p["b"]
        if li < n_layers - 1:
            scale = p["gamma"] * jax.lax.rsqrt(p["running_var"] + eps)   # (1, Dout)
            shift = p["beta"] - p["running_mean"] * scale
            w = w * scale                    # column scale (BN folded into Linear)
            b = b * scale + shift
        in_dim_pad = w.shape[0] if li == 0 else dims_out_pad[li - 1]
        w = _pad_to(w, (in_dim_pad, dims_out_pad[li]))
        b = _pad_to(b, (1, dims_out_pad[li]))
        wbs_f32 += [w, b]
        wbs_bf16 += [w.astype(jnp.bfloat16), b]   # bias stays f32 (f32 epilogue)

    return {"wbs_f32": wbs_f32, "wbs_bf16": wbs_bf16, "out_dim": dims_out[-1]}


# ----------------------------- Forward ---------------------------------------

@functools.partial(jax.jit, static_argnames=("out_dim", "use_bf16"))
def _forward_impl(x, wbs, *, out_dim, use_bf16):
    B, n_feat = x.shape
    d_out_pad = wbs[-1].shape[-1]
    kernel = functools.partial(_fused_mlp_kernel, use_bf16=use_bf16)

    if B <= _GRID_FREE_MAX_BATCH:
        # Grid-free fused call: whole arrays resident in VMEM, no pipeline loop.
        vmem = pl.BlockSpec(memory_space=pltpu.MemorySpace.VMEM)
        out_p = pl.pallas_call(
            kernel,
            out_shape=jax.ShapeDtypeStruct((B, d_out_pad), jnp.float32),
            in_specs=[vmem] * (1 + len(wbs)),
            out_specs=vmem,
        )(x, *wbs)
        return out_p[:, :out_dim]

    # Batch-tiled path: big tiles (>=2 of them) so per-step pipeline overhead is
    # amortized and both TensorCores get work on v7x.
    tile_m = min(_MAX_TILE_M, _round_up(pl.cdiv(B, 2), 256))
    b_pad = _round_up(B, tile_m)
    num_tiles = b_pad // tile_m
    x_p = x if b_pad == B else jnp.pad(x, ((0, b_pad - B), (0, 0)))

    in_specs = [pl.BlockSpec((tile_m, n_feat), lambda i: (i, 0))]
    for arr in wbs:
        # Constant block index: fetched once, VMEM-resident across the grid.
        in_specs.append(pl.BlockSpec(arr.shape, lambda i: (0, 0)))
    out_specs = pl.BlockSpec((tile_m, d_out_pad), lambda i: (i, 0))

    out_p = pl.pallas_call(
        kernel,
        out_shape=jax.ShapeDtypeStruct((b_pad, d_out_pad), jnp.float32),
        grid=(num_tiles,),
        in_specs=in_specs,
        out_specs=out_specs,
        compiler_params=pltpu.CompilerParams(
            dimension_semantics=("parallel",)),
    )(x_p, *wbs)
    # NOTE: this slice is an extra XLA copy; callers that can consume the
    # padded (b_pad, d_out_pad) slab may skip it.
    return out_p[:B, :out_dim]


def fc_encoder_forward(x, prepared, use_bf16=None):
    """x: (B, n_features) f32.  prepared: output of prepare_params()."""
    B = x.shape[0]
    if use_bf16 is None:
        # Large batches are MXU-bound -> bf16 operands (f32 accumulate) by default.
        use_bf16 = B > _GRID_FREE_MAX_BATCH
    wbs = prepared["wbs_bf16"] if use_bf16 else prepared["wbs_f32"]
    return _forward_impl(x, list(wbs), out_dim=prepared["out_dim"],
                         use_bf16=bool(use_bf16))


# ----------------------------- Reference ------------------------------------

def _reference_forward(x, params, eps=1e-5):
    for p in params[:-1]:
        y = x @ p["w"] + p["b"]
        y = (y - p["running_mean"]) / jnp.sqrt(p["running_var"] + eps)
        y = y * p["gamma"] + p["beta"]
        x = jnp.maximum(y, 0.0)
        # Dropout is identity in eval mode.
    p = params[-1]
    return jnp.maximum(x @ p["w"] + p["b"], 0.0)


if __name__ == "__main__":
    key = jax.random.PRNGKey(0)
    k_params, k_x, k_x2, k_x3 = jax.random.split(key, 4)

    n_features = 64
    embedding_size = 8
    params = init_fc_encoder_params(k_params, n_features, embedding_size)
    prepared = prepare_params(params)          # one-time fold / pad / bf16 cast

    # 1) Small batch: grid-free fully fused path, f32.
    x = jax.random.normal(k_x, (16, n_features), jnp.float32)
    out = jax.block_until_ready(fc_encoder_forward(x, prepared))
    ref = _reference_forward(x, params)
    assert out.shape == (16, embedding_size), out.shape
    assert jnp.allclose(out, ref, atol=1e-3, rtol=1e-3), "mismatch (small batch)"

    # 2) Large batch, forced f32: batch-tiled grid path (2 tiles of 768 rows).
    x2 = jax.random.normal(k_x2, (1536, n_features), jnp.float32)
    out2 = jax.block_until_ready(fc_encoder_forward(x2, prepared, use_bf16=False))
    ref2 = _reference_forward(x2, params)
    assert out2.shape == (1536, embedding_size), out2.shape
    assert jnp.allclose(out2, ref2, atol=1e-3, rtol=1e-3), "mismatch (tiled f32)"

    # 3) Large batch, default (auto bf16 matmuls, f32 epilogue) + ragged rows
    #    (1600 -> padded to 2 tiles of 1024).
    x3 = jax.random.normal(k_x3, (1600, n_features), jnp.float32)
    out3 = jax.block_until_ready(fc_encoder_forward(x3, prepared))
    ref3 = _reference_forward(x3, params)
    assert out3.shape == (1600, embedding_size), out3.shape
    assert jnp.allclose(out3, ref3, atol=5e-2, rtol=5e-2), "mismatch (tiled bf16)"

    print("KERNEL_OK")
</pallas_src>

<mosaic_0001>
module attributes {stable_mosaic.version = 11 : i64} {
  func.func @_fused_mlp_kernel(%arg0: memref<16x64xf32, #tpu.memory_space<vmem>>, %arg1: memref<64x256xf32, #tpu.memory_space<vmem>>, %arg2: memref<1x256xf32, #tpu.memory_space<vmem>>, %arg3: memref<256x256xf32, #tpu.memory_space<vmem>>, %arg4: memref<1x256xf32, #tpu.memory_space<vmem>>, %arg5: memref<256x256xf32, #tpu.memory_space<vmem>>, %arg6: memref<1x256xf32, #tpu.memory_space<vmem>>, %arg7: memref<256x128xf32, #tpu.memory_space<vmem>>, %arg8: memref<1x128xf32, #tpu.memory_space<vmem>>, %arg9: memref<128x128xf32, #tpu.memory_space<vmem>>, %arg10: memref<1x128xf32, #tpu.memory_space<vmem>>, %arg11: memref<16x128xf32, #tpu.memory_space<vmem>>) attributes {dimension_semantics = [], scalar_prefetch = 0 : i64, scratch_operands = 0 : i64, tpu.core_type = #tpu.core_type<tc>} {
    %c0 = arith.constant 0 : index
    %c0_0 = arith.constant 0 : index
    %0 = vector.load %arg0[%c0, %c0_0] : memref<16x64xf32, #tpu.memory_space<vmem>>, vector<16x64xf32>
    %c0_1 = arith.constant 0 : index
    %c0_2 = arith.constant 0 : index
    %1 = vector.load %arg1[%c0_1, %c0_2] : memref<64x256xf32, #tpu.memory_space<vmem>>, vector<64x256xf32>
    %c0_3 = arith.constant 0 : index
    %c0_4 = arith.constant 0 : index
    %2 = vector.load %arg2[%c0_3, %c0_4] : memref<1x256xf32, #tpu.memory_space<vmem>>, vector<1x256xf32>
    %cst = arith.constant dense<0.000000e+00> : vector<16x256xf32>
    %3 = tpu.matmul %0, %1, %cst {dimension_numbers = #tpu.dot_dimension_numbers<[1], [0], [0], [1], [0, 0, 1, 1], [], []>} : vector<16x64xf32>, vector<64x256xf32>, vector<16x256xf32> -> vector<16x256xf32>
    %4 = vector.broadcast %2 : vector<1x256xf32> to vector<16x256xf32>
    %5 = arith.addf %3, %4 : vector<16x256xf32>
    %cst_5 = arith.constant 0.000000e+00 : f32
    %6 = vector.broadcast %cst_5 : f32 to vector<16x256xf32>
    %7 = arith.maximumf %5, %6 : vector<16x256xf32>
    %c0_6 = arith.constant 0 : index
    %c0_7 = arith.constant 0 : index
    %8 = vector.load %arg3[%c0_6, %c0_7] : memref<256x256xf32, #tpu.memory_space<vmem>>, vector<256x256xf32>
    %c0_8 = arith.constant 0 : index
    %c0_9 = arith.constant 0 : index
    %9 = vector.load %arg4[%c0_8, %c0_9] : memref<1x256xf32, #tpu.memory_space<vmem>>, vector<1x256xf32>
    %cst_10 = arith.constant dense<0.000000e+00> : vector<16x256xf32>
    %10 = tpu.matmul %7, %8, %cst_10 {dimension_numbers = #tpu.dot_dimension_numbers<[1], [0], [0], [1], [0, 0, 1, 1], [], []>} : vector<16x256xf32>, vector<256x256xf32>, vector<16x256xf32> -> vector<16x256xf32>
    %11 = vector.broadcast %9 : vector<1x256xf32> to vector<16x256xf32>
    %12 = arith.addf %10, %11 : vector<16x256xf32>
    %cst_11 = arith.constant 0.000000e+00 : f32
    %13 = vector.broadcast %cst_11 : f32 to vector<16x256xf32>
    %14 = arith.maximumf %12, %13 : vector<16x256xf32>
    %c0_12 = arith.constant 0 : index
    %c0_13 = arith.constant 0 : index
    %15 = vector.load %arg5[%c0_12, %c0_13] : memref<256x256xf32, #tpu.memory_space<vmem>>, vector<256x256xf32>
    %c0_14 = arith.constant 0 : index
    %c0_15 = arith.constant 0 : index
    %16 = vector.load %arg6[%c0_14, %c0_15] : memref<1x256xf32, #tpu.memory_space<vmem>>, vector<1x256xf32>
    %cst_16 = arith.constant dense<0.000000e+00> : vector<16x256xf32>
    %17 = tpu.matmul %14, %15, %cst_16 {dimension_numbers = #tpu.dot_dimension_numbers<[1], [0], [0], [1], [0, 0, 1, 1], [], []>} : vector<16x256xf32>, vector<256x256xf32>, vector<16x256xf32> -> vector<16x256xf32>
    %18 = vector.broadcast %16 : vector<1x256xf32> to vector<16x256xf32>
    %19 = arith.addf %17, %18 : vector<16x256xf32>
    %cst_17 = arith.constant 0.000000e+00 : f32
    %20 = vector.broadcast %cst_17 : f32 to vector<16x256xf32>
    %21 = arith.maximumf %19, %20 : vector<16x256xf32>
    %c0_18 = arith.constant 0 : index
    %c0_19 = arith.constant 0 : index
    %22 = vector.load %arg7[%c0_18, %c0_19] : memref<256x128xf32, #tpu.memory_space<vmem>>, vector<256x128xf32>
    %c0_20 = arith.constant 0 : index
    %c0_21 = arith.constant 0 : index
    %23 = vector.load %arg8[%c0_20, %c0_21] : memref<1x128xf32, #tpu.memory_space<vmem>>, vector<1x128xf32>
    %cst_22 = arith.constant dense<0.000000e+00> : vector<16x128xf32>
    %24 = tpu.matmul %21, %22, %cst_22 {dimension_numbers = #tpu.dot_dimension_numbers<[1], [0], [0], [1], [0, 0, 1, 1], [], []>} : vector<16x256xf32>, vector<256x128xf32>, vector<16x128xf32> -> vector<16x128xf32>
    %25 = vector.broadcast %23 : vector<1x128xf32> to vector<16x128xf32>
    %26 = arith.addf %24, %25 : vector<16x128xf32>
    %cst_23 = arith.constant 0.000000e+00 : f32
    %27 = vector.broadcast %cst_23 : f32 to vector<16x128xf32>
    %28 = arith.maximumf %26, %27 : vector<16x128xf32>
    %c0_24 = arith.constant 0 : index
    %c0_25 = arith.constant 0 : index
    %29 = vector.load %arg9[%c0_24, %c0_25] : memref<128x128xf32, #tpu.memory_space<vmem>>, vector<128x128xf32>
    %c0_26 = arith.constant 0 : index
    %c0_27 = arith.constant 0 : index
    %30 = vector.load %arg10[%c0_26, %c0_27] : memref<1x128xf32, #tpu.memory_space<vmem>>, vector<1x128xf32>
    %cst_28 = arith.constant dense<0.000000e+00> : vector<16x128xf32>
    %31 = tpu.matmul %28, %29, %cst_28 {dimension_numbers = #tpu.dot_dimension_numbers<[1], [0], [0], [1], [0, 0, 1, 1], [], []>} : vector<16x128xf32>, vector<128x128xf32>, vector<16x128xf32> -> vector<16x128xf32>
    %32 = vector.broadcast %30 : vector<1x128xf32> to vector<16x128xf32>
    %33 = arith.addf %31, %32 : vector<16x128xf32>
    %cst_29 = arith.constant 0.000000e+00 : f32
    %34 = vector.broadcast %cst_29 : f32 to vector<16x128xf32>
    %35 = arith.maximumf %33, %34 : vector<16x128xf32>
    %c0_30 = arith.constant 0 : index
    %c0_31 = arith.constant 0 : index
    %36 = vector.load %arg11[%c0_30, %c0_31] : memref<16x128xf32, #tpu.memory_space<vmem>>, vector<16x128xf32>
    tpu.vector_store %arg11[%c0_30, %c0_31], %35 {strides = array<i32>} : memref<16x128xf32, #tpu.memory_space<vmem>>, vector<16x128xf32>,
    return
  }
}

</mosaic_0001>

<llo_original>
// kernel: _forward_impl.1
$region0: #{_forward_impl.1}
  #allocation0 [shape = 'u32[]', space=smem, size = 0x4, offset = 0x4, fixed_abs, tag = 'smem constant byte address 0x4 - core index']
  #allocation1 [shape = 'u32[144,128]{1,0:T(1,128)}', space=vmem, size = 0x12000, scoped, tag = 'internal scratch']
  %s0 = inlined_call_operand.hbm [shape: f32[16,64], index: 0, kind: input, shape index: {}]
  %s1 = inlined_call_operand.hbm [shape: f32[64,256], index: 1, kind: input, shape index: {}]
  %s2 = inlined_call_operand.vmem [shape: f32[1,256], index: 2, kind: input, shape index: {}]
  %s3 = inlined_call_operand.hbm [shape: f32[256,256], index: 3, kind: input, shape index: {}]
  %s4 = inlined_call_operand.vmem [shape: f32[1,256], index: 4, kind: input, shape index: {}]
  %s5 = inlined_call_operand.hbm [shape: f32[256,256], index: 5, kind: input, shape index: {}]
  %s6 = inlined_call_operand.vmem [shape: f32[1,256], index: 6, kind: input, shape index: {}]
  %s7 = inlined_call_operand.hbm [shape: f32[256,128], index: 7, kind: input, shape index: {}]
  %s8 = inlined_call_operand.vmem [shape: f32[1,128], index: 8, kind: input, shape index: {}]
  %s9 = inlined_call_operand.hbm [shape: f32[128,128], index: 9, kind: input, shape index: {}]
  %s10 = inlined_call_operand.vmem [shape: f32[1,128], index: 10, kind: input, shape index: {}]
  %s11 = inlined_call_operand.vmem [shape: f32[16,128], index: 11, kind: output, shape index: {}]
  %s12 = sld [smem:[#allocation0]]
  $region78: #{_forward_impl.1} parent=0
    _
  %s14 = ssub.s32 1, %s12
  %s15 = scalar_select 0, %s14, %s12
  $region1: #{_forward_impl.1} parent=0
    #allocation2 [shape = 'u8[8192]{0}', space=vmem, size = 0x2000, scoped, tag = 'input window, operand 0, single buffered']
    #allocation3 [shape = 's32[1]{0}', space=sflag, size = 0x4, scoped, tag = 'scoped memory for _forward_impl.1']
    #allocation4 [shape = 'u8[65536]{0}', space=vmem, size = 0x10000, scoped, tag = 'input window, operand 1, single buffered']
    #allocation5 [shape = 's32[1]{0}', space=sflag, size = 0x4, scoped, tag = 'scoped memory for _forward_impl.1']
    #allocation6 [shape = 'u8[262144]{0}', space=vmem, size = 0x40000, scoped, tag = 'input window, operand 3, single buffered']
    #allocation7 [shape = 'u8[262144]{0}', space=vmem, size = 0x40000, scoped, tag = 'input window, operand 5, single buffered']
    #allocation8 [shape = 's32[1]{0}', space=sflag, size = 0x4, scoped, tag = 'scoped memory for _forward_impl.1']
    #allocation9 [shape = 'u8[131072]{0}', space=vmem, size = 0x20000, scoped, tag = 'input window, operand 7, single buffered']
    #allocation10 [shape = 'u8[65536]{0}', space=vmem, size = 0x10000, scoped, tag = 'input window, operand 9, single buffered']
    #allocation11 [shape = 's32[1]{0}', space=sflag, size = 0x4, scoped, tag = 'scoped memory for _forward_impl.1']
    %16 = vsyncpa [#allocation3], 0
    %17 = vsyncpa [#allocation5], 0
    %18 = vsyncpa [#allocation8], 0
    %19 = vsyncpa [#allocation11], 0
    // Predicated region
    $region2: #{_forward_impl.1} parent=1 // pred_check
      _
    $region3: #{_forward_impl.1} parent=1 // pred_check_branch
      %21 = sbr.rel (0) target = $region5
    $region4: #{_forward_impl.1} parent=1 // pred_region
      %s23 = ssub.s32 256, 256
      %24 = vsyncadd [#allocation3], %s23
      %s25 = sshll.u32 [#allocation2], 4
      %s26 = int_to_ptr.vmem [resolvable:$true] %s25
      %31 = dma.hbm_to_vmem [thread:$0]  %s0, 256, %s26, [#allocation3], 128, 128, 8
    $region5: #{_forward_impl.1} parent=1 // pred_fallthru
      _
    // Predicated region
    $region6: #{_forward_impl.1} parent=1 // pred_check
      _
    $region7: #{_forward_impl.1} parent=1 // pred_check_branch
      %33 = sbr.rel (0) target = $region9
    $region8: #{_forward_impl.1} parent=1 // pred_region
      %s35 = ssub.s32 2048, 2048
      %36 = vsyncadd [#allocation5], %s35
      %s37 = sshll.u32 [#allocation4], 4
      %s38 = int_to_ptr.vmem [resolvable:$true] %s37
      %43 = dma.hbm_to_vmem [thread:$0]  %s1, 2048, %s38, [#allocation5], 256, 256, 16
    $region9: #{_forward_impl.1} parent=1 // pred_fallthru
      _
    // Predicated region
    $region10: #{_forward_impl.1} parent=1 // pred_check
      _
    $region11: #{_forward_impl.1} parent=1 // pred_check_branch
      %45 = sbr.rel (0) target = $region13
    $region12: #{_forward_impl.1} parent=1 // pred_region
      _
    $region13: #{_forward_impl.1} parent=1 // pred_fallthru
      _
    // Predicated region
    $region14: #{_forward_impl.1} parent=1 // pred_check
      _
    $region15: #{_forward_impl.1} parent=1 // pred_check_branch
      %47 = sbr.rel (0) target = $region17
    $region16: #{_forward_impl.1} parent=1 // pred_region
      %s49 = ssub.s32 8192, 8192
      %50 = vsyncadd [#allocation5], %s49
      %s51 = sshll.u32 [#allocation6], 4
      %s52 = int_to_ptr.vmem [resolvable:$true] %s51
      %57 = dma.hbm_to_vmem [thread:$0]  %s3, 8192, %s52, [#allocation5], 256, 256, 16
    $region17: #{_forward_impl.1} parent=1 // pred_fallthru
      _
    // Predicated region
    $region18: #{_forward_impl.1} parent=1 // pred_check
      _
    $region19: #{_forward_impl.1} parent=1 // pred_check_branch
      %59 = sbr.rel (0) target = $region21
    $region20: #{_forward_impl.1} parent=1 // pred_region
      _
    $region21: #{_forward_impl.1} parent=1 // pred_fallthru
      _
    // Predicated region
    $region22: #{_forward_impl.1} parent=1 // pred_check
      _
    $region23: #{_forward_impl.1} parent=1 // pred_check_branch
      %61 = sbr.rel (0) target = $region25
    $region24: #{_forward_impl.1} parent=1 // pred_region
      %s63 = ssub.s32 8192, 8192
      %64 = vsyncadd [#allocation8], %s63
      %s65 = sshll.u32 [#allocation7], 4
      %s66 = int_to_ptr.vmem [resolvable:$true] %s65
      %71 = dma.hbm_to_vmem [thread:$0]  %s5, 8192, %s66, [#allocation8], 256, 256, 16
    $region25: #{_forward_impl.1} parent=1 // pred_fallthru
      _
    // Predicated region
    $region26: #{_forward_impl.1} parent=1 // pred_check
      _
    $region27: #{_forward_impl.1} parent=1 // pred_check_branch
      %73 = sbr.rel (0) target = $region29
    $region28: #{_forward_impl.1} parent=1 // pred_region
      _
    $region29: #{_forward_impl.1} parent=1 // pred_fallthru
      _
    // Predicated region
    $region30: #{_forward_impl.1} parent=1 // pred_check
      _
    $region31: #{_forward_impl.1} parent=1 // pred_check_branch
      %75 = sbr.rel (0) target = $region33
    $region32: #{_forward_impl.1} parent=1 // pred_region
      %s77 = ssub.s32 4096, 4096
      %78 = vsyncadd [#allocation8], %s77
      %s79 = sshll.u32 [#allocation9], 4
      %s80 = int_to_ptr.vmem [resolvable:$true] %s79
      %85 = dma.hbm_to_vmem [thread:$0]  %s7, 4096, %s80, [#allocation8], 128, 128, 8
    $region33: #{_forward_impl.1} parent=1 // pred_fallthru
      _
    // Predicated region
    $region34: #{_forward_impl.1} parent=1 // pred_check
      _
    $region35: #{_forward_impl.1} parent=1 // pred_check_branch
      %87 = sbr.rel (0) target = $region37
    $region36: #{_forward_impl.1} parent=1 // pred_region
      _
    $region37: #{_forward_impl.1} parent=1 // pred_fallthru
      _
    // Predicated region
    $region38: #{_forward_impl.1} parent=1 // pred_check
      _
    $region39: #{_forward_impl.1} parent=1 // pred_check_branch
      %89 = sbr.rel (0) target = $region41
    $region40: #{_forward_impl.1} parent=1 // pred_region
      %s91 = ssub.s32 2048, 2048
      %92 = vsyncadd [#allocation11], %s91
      %s93 = sshll.u32 [#allocation10], 4
      %s94 = int_to_ptr.vmem [resolvable:$true] %s93
      %99 = dma.hbm_to_vmem [thread:$0]  %s9, 2048, %s94, [#allocation11], 128, 128, 8
    $region41: #{_forward_impl.1} parent=1 // pred_fallthru
      _
    // Predicated region
    $region42: #{_forward_impl.1} parent=1 // pred_check
      _
    $region43: #{_forward_impl.1} parent=1 // pred_check_branch
      %101 = sbr.rel (0) target = $region45
    $region44: #{_forward_impl.1} parent=1 // pred_region
      _
    $region45: #{_forward_impl.1} parent=1 // pred_fallthru
      _
    // Predicated region
    $region46: #{_forward_impl.1} parent=1 // pred_check
      _
    $region47: #{_forward_impl.1} parent=1 // pred_check_branch
      %103 = sbr.rel (0) target = $region49
    $region48: #{_forward_impl.1} parent=1 // pred_region
      %104 = dma.done [#allocation3], 256
    $region49: #{_forward_impl.1} parent=1 // pred_fallthru
      _
    // Predicated region
    $region50: #{_forward_impl.1} parent=1 // pred_check
      _
    $region51: #{_forward_impl.1} parent=1 // pred_check_branch
      %106 = sbr.rel (0) target = $region53
    $region52: #{_forward_impl.1} parent=1 // pred_region
      %107 = dma.done [#allocation5], 2048
    $region53: #{_forward_impl.1} parent=1 // pred_fallthru
      _
    // Predicated region
    $region54: #{_forward_impl.1} parent=1 // pred_check
      _
    $region55: #{_forward_impl.1} parent=1 // pred_check_branch
      %109 = sbr.rel (0) target = $region57
    $region56: #{_forward_impl.1} parent=1 // pred_region
      %110 = dma.done [#allocation5], 8192
    $region57: #{_forward_impl.1} parent=1 // pred_fallthru
      _
    // Predicated region
    $region58: #{_forward_impl.1} parent=1 // pred_check
      _
    $region59: #{_forward_impl.1} parent=1 // pred_check_branch
      %112 = sbr.rel (0) target = $region61
    $region60: #{_forward_impl.1} parent=1 // pred_region
      %113 = dma.done [#allocation8], 8192
    $region61: #{_forward_impl.1} parent=1 // pred_fallthru
      _
    // Predicated region
    $region62: #{_forward_impl.1} parent=1 // pred_check
      _
    $region63: #{_forward_impl.1} parent=1 // pred_check_branch
      %115 = sbr.rel (0) target = $region65
    $region64: #{_forward_impl.1} parent=1 // pred_region
      %116 = dma.done [#allocation8], 4096
    $region65: #{_forward_impl.1} parent=1 // pred_fallthru
      _
    // Predicated region
    $region66: #{_forward_impl.1} parent=1 // pred_check
      _
    $region67: #{_forward_impl.1} parent=1 // pred_check_branch
      %118 = sbr.rel (0) target = $region69
    $region68: #{_forward_impl.1} parent=1 // pred_region
      %119 = dma.done [#allocation11], 2048
    $region69: #{_forward_impl.1} parent=1 // pred_fallthru
      _
    %v120 = vld [vmem:[#allocation2] sm:$0xff]
    %v121 = vld [vmem:[#allocation2 + $0x8] sm:$0xff]
    %v122 = vld [vmem:[#allocation4] sm:$0xff]
    %v123 = vld [vmem:[#allocation4 + $0x8] sm:$0xff]
    %v124 = vld [vmem:[#allocation4 + $0x10] sm:$0xff]
    %v125 = vld [vmem:[#allocation4 + $0x18] sm:$0xff]
    %v126 = vld [vmem:[#allocation4 + $0x20] sm:$0xff]
    %v127 = vld [vmem:[#allocation4 + $0x28] sm:$0xff]
    %v128 = vld [vmem:[#allocation4 + $0x30] sm:$0xff]
    %v129 = vld [vmem:[#allocation4 + $0x38] sm:$0xff]
    %v130 = vld [vmem:[#allocation4 + $0x40] sm:$0xff]
    %v131 = vld [vmem:[#allocation4 + $0x48] sm:$0xff]
    %v132 = vld [vmem:[#allocation4 + $0x50] sm:$0xff]
    %v133 = vld [vmem:[#allocation4 + $0x58] sm:$0xff]
    %v134 = vld [vmem:[#allocation4 + $0x60] sm:$0xff]
    %v135 = vld [vmem:[#allocation4 + $0x68] sm:$0xff]
    %v136 = vld [vmem:[#allocation4 + $0x70] sm:$0xff]
    %v137 = vld [vmem:[#allocation4 + $0x78] sm:$0xff]
    %v138 = vld [vmem:[%s2] sm:$0x3]
    %v140 = vlaneseq
    %v141 = vshrl.u32 %v140, 7
    %v142 = vsub.s32 0, %v141
    %v143 = vrot.slane %v138, %v142
    %v144 = vlaneseq
    %v145 = vshrl.u32 %v144, 7
    %v146 = vsub.s32 1, %v145
    %v147 = vrot.slane %v138, %v146
    %vm150 = vcmask 523264
    %v152 = vsel %vm150, %v120, 0
    %v155 = vsel %vm150, %v121, 0
    %157 = vmatprep.subr.mxu0 0.0
    %158 = vmatpush1.msra.mxu0 0.0
    %159 = vmatprep.subr.mxu0 0.0
    %160 = vmatpush1.msra.mxu0 0.0
    %161 = vmatprep.subr.mxu0 0.0
    %162 = vmatpush1.msra.mxu0 0.0
    %163 = vmatprep.subr.mxu0 0.0
    %164 = vmatpush1.msra.mxu0 0.0
    %165 = vmatprep.subr.mxu0 0.0
    %166 = vmatpush1.msra.mxu0 0.0
    %167 = vmatprep.subr.mxu0 0.0
    %168 = vmatpush1.msra.mxu0 0.0
    %169 = vmatprep.subr.mxu0 0.0
    %170 = vmatpush1.msra.mxu0 0.0
    %171 = vmatprep.subr.mxu0 0.0
    %172 = vmatpush1.msra.mxu0 0.0
    %173 = vmatprep.subr.mxu0 %v137
    %174 = vmatpush1.msra.mxu0 %v136
    %175 = vmatprep.subr.mxu0 %v135
    %176 = vmatpush1.msra.mxu0 %v134
    %177 = vmatprep.subr.mxu0 %v133
    %178 = vmatpush1.msra.mxu0 %v132
    %179 = vmatprep.subr.mxu0 %v131
    %180 = vmatpush1.msra.mxu0 %v130
    %181 = vmatprep.subr.mxu0 %v129
    %182 = vmatpush1.msra.mxu0 %v128
    %183 = vmatprep.subr.mxu0 %v127
    %184 = vmatpush1.msra.mxu0 %v126
    %185 = vmatprep.subr.mxu0 %v125
    %186 = vmatpush1.msra.mxu0 %v124
    %187 = vmatprep.subr.mxu0 %v123
    %188 = vmatpush1.msra.mxu0 %v122
    %189 = vmatprep.subr.mxu0 0.0
    %190 = vmatpush2.msra.mxu0 0.0
    %191 = vmatprep.subr.mxu0 0.0
    %192 = vmatpush2.msra.mxu0 0.0
    %193 = vmatprep.subr.mxu0 0.0
    %194 = vmatpush2.msra.mxu0 0.0
    %195 = vmatprep.subr.mxu0 0.0
    %196 = vmatpush2.msra.mxu0 0.0
    %197 = vmatprep.subr.mxu0 0.0
    %198 = vmatpush2.msra.mxu0 0.0
    %199 = vmatprep.subr.mxu0 0.0
    %200 = vmatpush2.msra.mxu0 0.0
    %201 = vmatprep.subr.mxu0 0.0
    %202 = vmatpush2.msra.mxu0 0.0
    %203 = vmatprep.subr.mxu0 0.0
    %204 = vmatpush2.msra.mxu0 0.0
    %205 = vmatprep.subr.mxu0 0.0
    %206 = vmatpush2.msra.mxu0 0.0
    %207 = vmatprep.subr.mxu0 0.0
    %208 = vmatpush2.msra.mxu0 0.0
    %209 = vmatprep.subr.mxu0 0.0
    %210 = vmatpush2.msra.mxu0 0.0
    %211 = vmatprep.subr.mxu0 0.0
    %212 = vmatpush2.msra.mxu0 0.0
    %213 = vmatprep.subr.mxu0 0.0
    %214 = vmatpush2.msra.mxu0 0.0
    %215 = vmatprep.subr.mxu0 0.0
    %216 = vmatpush2.msra.mxu0 0.0
    %217 = vmatprep.subr.mxu0 0.0
    %218 = vmatpush2.msra.mxu0 0.0
    %219 = vmatprep.subr.mxu0 0.0
    %220 = vmatpush2.msra.mxu0 0.0
    %221 = vmatprep.mubr.f32.mxu0 0.0
    %222 = vmatmul.mubr.f32.gmra.mxu0 %v152
    %v223 = vpop.f32.mrf.mxu0
    %v224 = vadd.f32 %v143, %v223
    %v225 = vpop.f32.mrf.mxu0
    %v226 = vadd.f32 %v147, %v225
    %227 = vmatprep.mubr.f32.mxu0 0.0
    %228 = vmatmul.mubr.f32.gmra.mxu0 %v155
    %v229 = vpop.f32.mrf.mxu0
    %v230 = vadd.f32 %v143, %v229
    %v231 = vpop.f32.mrf.mxu0
    %v232 = vadd.f32 %v147, %v231
    %233 = vdwg.mxu0
    %v234 = vmax.f32 %v224, 0.0
    %v235 = vmax.f32 %v226, 0.0
    %v236 = vmax.f32 %v230, 0.0
    %v237 = vmax.f32 %v232, 0.0
    %v238 = vld [vmem:[#allocation6] sm:$0xff]
    %v239 = vld [vmem:[#allocation6 + $0x8] sm:$0xff]
    %v240 = vld [vmem:[#allocation6 + $0x10] sm:$0xff]
    %v241 = vld [vmem:[#allocation6 + $0x18] sm:$0xff]
    %v242 = vld [vmem:[#allocation6 + $0x20] sm:$0xff]
    %v243 = vld [vmem:[#allocation6 + $0x28] sm:$0xff]
    %v244 = vld [vmem:[#allocation6 + $0x30] sm:$0xff]
    %v245 = vld [vmem:[#allocation6 + $0x38] sm:$0xff]
    %v246 = vld [vmem:[#allocation6 + $0x40] sm:$0xff]
    %v247 = vld [vmem:[#allocation6 + $0x48] sm:$0xff]
    %v248 = vld [vmem:[#allocation6 + $0x50] sm:$0xff]
    %v249 = vld [vmem:[#allocation6 + $0x58] sm:$0xff]
    %v250 = vld [vmem:[#allocation6 + $0x60] sm:$0xff]
    %v251 = vld [vmem:[#allocation6 + $0x68] sm:$0xff]
    %v252 = vld [vmem:[#allocation6 + $0x70] sm:$0xff]
    %v253 = vld [vmem:[#allocation6 + $0x78] sm:$0xff]
    %v254 = vld [vmem:[#allocation6 + $0x80] sm:$0xff]
    %v255 = vld [vmem:[#allocation6 + $0x88] sm:$0xff]
    %v256 = vld [vmem:[#allocation6 + $0x90] sm:$0xff]
    %v257 = vld [vmem:[#allocation6 + $0x98] sm:$0xff]
    %v258 = vld [vmem:[#allocation6 + $0xa0] sm:$0xff]
    %v259 = vld [vmem:[#allocation6 + $0xa8] sm:$0xff]
    %v260 = vld [vmem:[#allocation6 + $0xb0] sm:$0xff]
    %v261 = vld [vmem:[#allocation6 + $0xb8] sm:$0xff]
    %v262 = vld [vmem:[#allocation6 + $0xc0] sm:$0xff]
    %v263 = vld [vmem:[#allocation6 + $0xc8] sm:$0xff]
    %v264 = vld [vmem:[#allocation6 + $0xd0] sm:$0xff]
    %v265 = vld [vmem:[#allocation6 + $0xd8] sm:$0xff]
    %v266 = vld [vmem:[#allocation6 + $0xe0] sm:$0xff]
    %v267 = vld [vmem:[#allocation6 + $0xe8] sm:$0xff]
    %v268 = vld [vmem:[#allocation6 + $0xf0] sm:$0xff]
    %v269 = vld [vmem:[#allocation6 + $0xf8] sm:$0xff]
    %v270 = vld [vmem:[#allocation6 + $0x100] sm:$0xff]
    %v271 = vld [vmem:[#allocation6 + $0x108] sm:$0xff]
    %v272 = vld [vmem:[#allocation6 + $0x110] sm:$0xff]
    %v273 = vld [vmem:[#allocation6 + $0x118] sm:$0xff]
    %v274 = vld [vmem:[#allocation6 + $0x120] sm:$0xff]
    %v275 = vld [vmem:[#allocation6 + $0x128] sm:$0xff]
    %v276 = vld [vmem:[#allocation6 + $0x130] sm:$0xff]
    %v277 = vld [vmem:[#allocation6 + $0x138] sm:$0xff]
    %v278 = vld [vmem:[#allocation6 + $0x140] sm:$0xff]
    %v279 = vld [vmem:[#allocation6 + $0x148] sm:$0xff]
    %v280 = vld [vmem:[#allocation6 + $0x150] sm:$0xff]
    %v281 = vld [vmem:[#allocation6 + $0x158] sm:$0xff]
    %v282 = vld [vmem:[#allocation6 + $0x160] sm:$0xff]
    %v283 = vld [vmem:[#allocation6 + $0x168] sm:$0xff]
    %v284 = vld [vmem:[#allocation6 + $0x170] sm:$0xff]
    %v285 = vld [vmem:[#allocation6 + $0x178] sm:$0xff]
    %v286 = vld [vmem:[#allocation6 + $0x180] sm:$0xff]
    %v287 = vld [vmem:[#allocation6 + $0x188] sm:$0xff]
    %v288 = vld [vmem:[#allocation6 + $0x190] sm:$0xff]
    %v289 = vld [vmem:[#allocation6 + $0x198] sm:$0xff]
    %v290 = vld [vmem:[#allocation6 + $0x1a0] sm:$0xff]
    %v291 = vld [vmem:[#allocation6 + $0x1a8] sm:$0xff]
    %v292 = vld [vmem:[#allocation6 + $0x1b0] sm:$0xff]
    %v293 = vld [vmem:[#allocation6 + $0x1b8] sm:$0xff]
    %v294 = vld [vmem:[#allocation6 + $0x1c0] sm:$0xff]
    %v295 = vld [vmem:[#allocation6 + $0x1c8] sm:$0xff]
    %v296 = vld [vmem:[#allocation6 + $0x1d0] sm:$0xff]
    %v297 = vld [vmem:[#allocation6 + $0x1d8] sm:$0xff]
    %v298 = vld [vmem:[#allocation6 + $0x1e0] sm:$0xff]
    %v299 = vld [vmem:[#allocation6 + $0x1e8] sm:$0xff]
    %v300 = vld [vmem:[#allocation6 + $0x1f0] sm:$0xff]
    %v301 = vld [vmem:[#allocation6 + $0x1f8] sm:$0xff]
    %v302 = vld [vmem:[%s4] sm:$0x3]
    %v304 = vlaneseq
    %v305 = vshrl.u32 %v304, 7
    %v306 = vsub.s32 0, %v305
    %v307 = vrot.slane %v302, %v306
    %v308 = vlaneseq
    %v309 = vshrl.u32 %v308, 7
    %v310 = vsub.s32 1, %v309
    %v311 = vrot.slane %v302, %v310
    %314 = vmatprep.subr.mxu0 %v269
    %315 = vmatpush1.msra.mxu0 %v268
    %316 = vmatprep.subr.mxu0 %v267
    %317 = vmatpush1.msra.mxu0 %v266
    %318 = vmatprep.subr.mxu0 %v265
    %319 = vmatpush1.msra.mxu0 %v264
    %320 = vmatprep.subr.mxu0 %v263
    %321 = vmatpush1.msra.mxu0 %v262
    %322 = vmatprep.subr.mxu0 %v261
    %323 = vmatpush1.msra.mxu0 %v260
    %324 = vmatprep.subr.mxu0 %v259
    %325 = vmatpush1.msra.mxu0 %v258
    %326 = vmatprep.subr.mxu0 %v257
    %327 = vmatpush1.msra.mxu0 %v256
    %328 = vmatprep.subr.mxu0 %v255
    %329 = vmatpush1.msra.mxu0 %v254
    %330 = vmatprep.subr.mxu0 %v253
    %331 = vmatpush1.msra.mxu0 %v252
    %332 = vmatprep.subr.mxu0 %v251
    %333 = vmatpush1.msra.mxu0 %v250
    %334 = vmatprep.subr.mxu0 %v249
    %335 = vmatpush1.msra.mxu0 %v248
    %336 = vmatprep.subr.mxu0 %v247
    %337 = vmatpush1.msra.mxu0 %v246
    %338 = vmatprep.subr.mxu0 %v245
    %339 = vmatpush1.msra.mxu0 %v244
    %340 = vmatprep.subr.mxu0 %v243
    %341 = vmatpush1.msra.mxu0 %v242
    %342 = vmatprep.subr.mxu0 %v241
    %343 = vmatpush1.msra.mxu0 %v240
    %344 = vmatprep.subr.mxu0 %v239
    %345 = vmatpush1.msra.mxu0 %v238
    %346 = vmatprep.subr.mxu0 %v301
    %347 = vmatpush2.msra.mxu0 %v300
    %348 = vmatprep.subr.mxu0 %v299
    %349 = vmatpush2.msra.mxu0 %v298
    %350 = vmatprep.subr.mxu0 %v297
    %351 = vmatpush2.msra.mxu0 %v296
    %352 = vmatprep.subr.mxu0 %v295
    %353 = vmatpush2.msra.mxu0 %v294
    %354 = vmatprep.subr.mxu0 %v293
    %355 = vmatpush2.msra.mxu0 %v292
    %356 = vmatprep.subr.mxu0 %v291
    %357 = vmatpush2.msra.mxu0 %v290
    %358 = vmatprep.subr.mxu0 %v289
    %359 = vmatpush2.msra.mxu0 %v288
    %360 = vmatprep.subr.mxu0 %v287
    %361 = vmatpush2.msra.mxu0 %v286
    %362 = vmatprep.subr.mxu0 %v285
    %363 = vmatpush2.msra.mxu0 %v284
    %364 = vmatprep.subr.mxu0 %v283
    %365 = vmatpush2.msra.mxu0 %v282
    %366 = vmatprep.subr.mxu0 %v281
    %367 = vmatpush2.msra.mxu0 %v280
    %368 = vmatprep.subr.mxu0 %v279
    %369 = vmatpush2.msra.mxu0 %v278
    %370 = vmatprep.subr.mxu0 %v277
    %371 = vmatpush2.msra.mxu0 %v276
    %372 = vmatprep.subr.mxu0 %v275
    %373 = vmatpush2.msra.mxu0 %v274
    %374 = vmatprep.subr.mxu0 %v273
    %375 = vmatpush2.msra.mxu0 %v272
    %376 = vmatprep.subr.mxu0 %v271
    %377 = vmatpush2.msra.mxu0 %v270
    %378 = vmatprep.mubr.f32.mxu0 %v235
    %379 = vmatmul.mubr.f32.gmra.mxu0 %v234
    %v380 = vpop.f32.mrf.mxu0
    %v381 = vadd.f32 %v307, %v380
    %v382 = vpop.f32.mrf.mxu0
    %v383 = vadd.f32 %v311, %v382
    %384 = vmatprep.mubr.f32.mxu0 %v237
    %385 = vmatmul.mubr.f32.gmra.mxu0 %v236
    %v386 = vpop.f32.mrf.mxu0
    %v387 = vadd.f32 %v307, %v386
    %v388 = vpop.f32.mrf.mxu0
    %v389 = vadd.f32 %v311, %v388
    %390 = vdwg.mxu0
    %v391 = vmax.f32 %v381, 0.0
    %v392 = vmax.f32 %v383, 0.0
    %v393 = vmax.f32 %v387, 0.0
    %v394 = vmax.f32 %v389, 0.0
    %v395 = vld [vmem:[#allocation7] sm:$0xff]
    %v396 = vld [vmem:[#allocation7 + $0x8] sm:$0xff]
    %v397 = vld [vmem:[#allocation7 + $0x10] sm:$0xff]
    %v398 = vld [vmem:[#allocation7 + $0x18] sm:$0xff]
    %v399 = vld [vmem:[#allocation7 + $0x20] sm:$0xff]
    %v400 = vld [vmem:[#allocation7 + $0x28] sm:$0xff]
    %v401 = vld [vmem:[#allocation7 + $0x30] sm:$0xff]
    %v402 = vld [vmem:[#allocation7 + $0x38] sm:$0xff]
    %v403 = vld [vmem:[#allocation7 + $0x40] sm:$0xff]
    %v404 = vld [vmem:[#allocation7 + $0x48] sm:$0xff]
    %v405 = vld [vmem:[#allocation7 + $0x50] sm:$0xff]
    %v406 = vld [vmem:[#allocation7 + $0x58] sm:$0xff]
    %v407 = vld [vmem:[#allocation7 + $0x60] sm:$0xff]
    %v408 = vld [vmem:[#allocation7 + $0x68] sm:$0xff]
    %v409 = vld [vmem:[#allocation7 + $0x70] sm:$0xff]
    %v410 = vld [vmem:[#allocation7 + $0x78] sm:$0xff]
    %v411 = vld [vmem:[#allocation7 + $0x80] sm:$0xff]
    %v412 = vld [vmem:[#allocation7 + $0x88] sm:$0xff]
    %v413 = vld [vmem:[#allocation7 + $0x90] sm:$0xff]
    %v414 = vld [vmem:[#allocation7 + $0x98] sm:$0xff]
    %v415 = vld [vmem:[#allocation7 + $0xa0] sm:$0xff]
    %v416 = vld [vmem:[#allocation7 + $0xa8] sm:$0xff]
    %v417 = vld [vmem:[#allocation7 + $0xb0] sm:$0xff]
    %v418 = vld [vmem:[#allocation7 + $0xb8] sm:$0xff]
    %v419 = vld [vmem:[#allocation7 + $0xc0] sm:$0xff]
    %v420 = vld [vmem:[#allocation7 + $0xc8] sm:$0xff]
    %v421 = vld [vmem:[#allocation7 + $0xd0] sm:$0xff]
    %v422 = vld [vmem:[#allocation7 + $0xd8] sm:$0xff]
    %v423 = vld [vmem:[#allocation7 + $0xe0] sm:$0xff]
    %v424 = vld [vmem:[#allocation7 + $0xe8] sm:$0xff]
    %v425 = vld [vmem:[#allocation7 + $0xf0] sm:$0xff]
    %v426 = vld [vmem:[#allocation7 + $0xf8] sm:$0xff]
    %v427 = vld [vmem:[#allocation7 + $0x100] sm:$0xff]
    %v428 = vld [vmem:[#allocation7 + $0x108] sm:$0xff]
    %v429 = vld [vmem:[#allocation7 + $0x110] sm:$0xff]
    %v430 = vld [vmem:[#allocation7 + $0x118] sm:$0xff]
    %v431 = vld [vmem:[#allocation7 + $0x120] sm:$0xff]
    %v432 = vld [vmem:[#allocation7 + $0x128] sm:$0xff]
    %v433 = vld [vmem:[#allocation7 + $0x130] sm:$0xff]
    %v434 = vld [vmem:[#allocation7 + $0x138] sm:$0xff]
    %v435 = vld [vmem:[#allocation7 + $0x140] sm:$0xff]
    %v436 = vld [vmem:[#allocation7 + $0x148] sm:$0xff]
    %v437 = vld [vmem:[#allocation7 + $0x150] sm:$0xff]
    %v438 = vld [vmem:[#allocation7 + $0x158] sm:$0xff]
    %v439 = vld [vmem:[#allocation7 + $0x160] sm:$0xff]
    %v440 = vld [vmem:[#allocation7 + $0x168] sm:$0xff]
    %v441 = vld [vmem:[#allocation7 + $0x170] sm:$0xff]
    %v442 = vld [vmem:[#allocation7 + $0x178] sm:$0xff]
    %v443 = vld [vmem:[#allocation7 + $0x180] sm:$0xff]
    %v444 = vld [vmem:[#allocation7 + $0x188] sm:$0xff]
    %v445 = vld [vmem:[#allocation7 + $0x190] sm:$0xff]
    %v446 = vld [vmem:[#allocation7 + $0x198] sm:$0xff]
    %v447 = vld [vmem:[#allocation7 + $0x1a0] sm:$0xff]
    %v448 = vld [vmem:[#allocation7 + $0x1a8] sm:$0xff]
    %v449 = vld [vmem:[#allocation7 + $0x1b0] sm:$0xff]
    %v450 = vld [vmem:[#allocation7 + $0x1b8] sm:$0xff]
    %v451 = vld [vmem:[#allocation7 + $0x1c0] sm:$0xff]
    %v452 = vld [vmem:[#allocation7 + $0x1c8] sm:$0xff]
    %v453 = vld [vmem:[#allocation7 + $0x1d0] sm:$0xff]
    %v454 = vld [vmem:[#allocation7 + $0x1d8] sm:$0xff]
    %v455 = vld [vmem:[#allocation7 + $0x1e0] sm:$0xff]
    %v456 = vld [vmem:[#allocation7 + $0x1e8] sm:$0xff]
    %v457 = vld [vmem:[#allocation7 + $0x1f0] sm:$0xff]
    %v458 = vld [vmem:[#allocation7 + $0x1f8] sm:$0xff]
    %v459 = vld [vmem:[%s6] sm:$0x3]
    %v461 = vlaneseq
    %v462 = vshrl.u32 %v461, 7
    %v463 = vsub.s32 0, %v462
    %v464 = vrot.slane %v459, %v463
    %v465 = vlaneseq
    %v466 = vshrl.u32 %v465, 7
    %v467 = vsub.s32 1, %v466
    %v468 = vrot.slane %v459, %v467
    %471 = vmatprep.subr.mxu0 %v426
    %472 = vmatpush1.msra.mxu0 %v425
    %473 = vmatprep.subr.mxu0 %v424
    %474 = vmatpush1.msra.mxu0 %v423
    %475 = vmatprep.subr.mxu0 %v422
    %476 = vmatpush1.msra.mxu0 %v421
    %477 = vmatprep.subr.mxu0 %v420
    %478 = vmatpush1.msra.mxu0 %v419
    %479 = vmatprep.subr.mxu0 %v418
    %480 = vmatpush1.msra.mxu0 %v417
    %481 = vmatprep.subr.mxu0 %v416
    %482 = vmatpush1.msra.mxu0 %v415
    %483 = vmatprep.subr.mxu0 %v414
    %484 = vmatpush1.msra.mxu0 %v413
    %485 = vmatprep.subr.mxu0 %v412
    %486 = vmatpush1.msra.mxu0 %v411
    %487 = vmatprep.subr.mxu0 %v410
    %488 = vmatpush1.msra.mxu0 %v409
    %489 = vmatprep.subr.mxu0 %v408
    %490 = vmatpush1.msra.mxu0 %v407
    %491 = vmatprep.subr.mxu0 %v406
    %492 = vmatpush1.msra.mxu0 %v405
    %493 = vmatprep.subr.mxu0 %v404
    %494 = vmatpush1.msra.mxu0 %v403
    %495 = vmatprep.subr.mxu0 %v402
    %496 = vmatpush1.msra.mxu0 %v401
    %497 = vmatprep.subr.mxu0 %v400
    %498 = vmatpush1.msra.mxu0 %v399
    %499 = vmatprep.subr.mxu0 %v398
    %500 = vmatpush1.msra.mxu0 %v397
    %501 = vmatprep.subr.mxu0 %v396
    %502 = vmatpush1.msra.mxu0 %v395
    %503 = vmatprep.subr.mxu0 %v458
    %504 = vmatpush2.msra.mxu0 %v457
    %505 = vmatprep.subr.mxu0 %v456
    %506 = vmatpush2.msra.mxu0 %v455
    %507 = vmatprep.subr.mxu0 %v454
    %508 = vmatpush2.msra.mxu0 %v453
    %509 = vmatprep.subr.mxu0 %v452
    %510 = vmatpush2.msra.mxu0 %v451
    %511 = vmatprep.subr.mxu0 %v450
    %512 = vmatpush2.msra.mxu0 %v449
    %513 = vmatprep.subr.mxu0 %v448
    %514 = vmatpush2.msra.mxu0 %v447
    %515 = vmatprep.subr.mxu0 %v446
    %516 = vmatpush2.msra.mxu0 %v445
    %517 = vmatprep.subr.mxu0 %v444
    %518 = vmatpush2.msra.mxu0 %v443
    %519 = vmatprep.subr.mxu0 %v442
    %520 = vmatpush2.msra.mxu0 %v441
    %521 = vmatprep.subr.mxu0 %v440
    %522 = vmatpush2.msra.mxu0 %v439
    %523 = vmatprep.subr.mxu0 %v438
    %524 = vmatpush2.msra.mxu0 %v437
    %525 = vmatprep.subr.mxu0 %v436
    %526 = vmatpush2.msra.mxu0 %v435
    %527 = vmatprep.subr.mxu0 %v434
    %528 = vmatpush2.msra.mxu0 %v433
    %529 = vmatprep.subr.mxu0 %v432
    %530 = vmatpush2.msra.mxu0 %v431
    %531 = vmatprep.subr.mxu0 %v430
    %532 = vmatpush2.msra.mxu0 %v429
    %533 = vmatprep.subr.mxu0 %v428
    %534 = vmatpush2.msra.mxu0 %v427
    %535 = vmatprep.mubr.f32.mxu0 %v392
    %536 = vmatmul.mubr.f32.gmra.mxu0 %v391
    %v537 = vpop.f32.mrf.mxu0
    %v538 = vadd.f32 %v464, %v537
    %v539 = vpop.f32.mrf.mxu0
    %v540 = vadd.f32 %v468, %v539
    %541 = vmatprep.mubr.f32.mxu0 %v394
    %542 = vmatmul.mubr.f32.gmra.mxu0 %v393
    %v543 = vpop.f32.mrf.mxu0
    %v544 = vadd.f32 %v464, %v543
    %v545 = vpop.f32.mrf.mxu0
    %v546 = vadd.f32 %v468, %v545
    %547 = vdwg.mxu0
    %v548 = vmax.f32 %v538, 0.0
    %v549 = vmax.f32 %v540, 0.0
    %v550 = vmax.f32 %v544, 0.0
    %v551 = vmax.f32 %v546, 0.0
    %v552 = vld [vmem:[#allocation9] sm:$0xff]
    %v553 = vld [vmem:[#allocation9 + $0x8] sm:$0xff]
    %v554 = vld [vmem:[#allocation9 + $0x10] sm:$0xff]
    %v555 = vld [vmem:[#allocation9 + $0x18] sm:$0xff]
    %v556 = vld [vmem:[#allocation9 + $0x20] sm:$0xff]
    %v557 = vld [vmem:[#allocation9 + $0x28] sm:$0xff]
    %v558 = vld [vmem:[#allocation9 + $0x30] sm:$0xff]
    %v559 = vld [vmem:[#allocation9 + $0x38] sm:$0xff]
    %v560 = vld [vmem:[#allocation9 + $0x40] sm:$0xff]
    %v561 = vld [vmem:[#allocation9 + $0x48] sm:$0xff]
    %v562 = vld [vmem:[#allocation9 + $0x50] sm:$0xff]
    %v563 = vld [vmem:[#allocation9 + $0x58] sm:$0xff]
    %v564 = vld [vmem:[#allocation9 + $0x60] sm:$0xff]
    %v565 = vld [vmem:[#allocation9 + $0x68] sm:$0xff]
    %v566 = vld [vmem:[#allocation9 + $0x70] sm:$0xff]
    %v567 = vld [vmem:[#allocation9 + $0x78] sm:$0xff]
    %v568 = vld [vmem:[#allocation9 + $0x80] sm:$0xff]
    %v569 = vld [vmem:[#allocation9 + $0x88] sm:$0xff]
    %v570 = vld [vmem:[#allocation9 + $0x90] sm:$0xff]
    %v571 = vld [vmem:[#allocation9 + $0x98] sm:$0xff]
    %v572 = vld [vmem:[#allocation9 + $0xa0] sm:$0xff]
    %v573 = vld [vmem:[#allocation9 + $0xa8] sm:$0xff]
    %v574 = vld [vmem:[#allocation9 + $0xb0] sm:$0xff]
    %v575 = vld [vmem:[#allocation9 + $0xb8] sm:$0xff]
    %v576 = vld [vmem:[#allocation9 + $0xc0] sm:$0xff]
    %v577 = vld [vmem:[#allocation9 + $0xc8] sm:$0xff]
    %v578 = vld [vmem:[#allocation9 + $0xd0] sm:$0xff]
    %v579 = vld [vmem:[#allocation9 + $0xd8] sm:$0xff]
    %v580 = vld [vmem:[#allocation9 + $0xe0] sm:$0xff]
    %v581 = vld [vmem:[#allocation9 + $0xe8] sm:$0xff]
    %v582 = vld [vmem:[#allocation9 + $0xf0] sm:$0xff]
    %v583 = vld [vmem:[#allocation9 + $0xf8] sm:$0xff]
    %v584 = vld [vmem:[%s8] sm:$0x1]
    %v586 = vlaneseq
    %v587 = vshrl.u32 %v586, 7
    %v588 = vsub.s32 0, %v587
    %v589 = vrot.slane %v584, %v588
    %591 = vmatprep.subr.mxu0 0.0
    %592 = vmatpush1.msra.mxu0 %v567
    %593 = vmatprep.subr.mxu0 0.0
    %594 = vmatpush1.msra.mxu0 %v566
    %595 = vmatprep.subr.mxu0 0.0
    %596 = vmatpush1.msra.mxu0 %v565
    %597 = vmatprep.subr.mxu0 0.0
    %598 = vmatpush1.msra.mxu0 %v564
    %599 = vmatprep.subr.mxu0 0.0
    %600 = vmatpush1.msra.mxu0 %v563
    %601 = vmatprep.subr.mxu0 0.0
    %602 = vmatpush1.msra.mxu0 %v562
    %603 = vmatprep.subr.mxu0 0.0
    %604 = vmatpush1.msra.mxu0 %v561
    %605 = vmatprep.subr.mxu0 0.0
    %606 = vmatpush1.msra.mxu0 %v560
    %607 = vmatprep.subr.mxu0 0.0
    %608 = vmatpush1.msra.mxu0 %v559
    %609 = vmatprep.subr.mxu0 0.0
    %610 = vmatpush1.msra.mxu0 %v558
    %611 = vmatprep.subr.mxu0 0.0
    %612 = vmatpush1.msra.mxu0 %v557
    %613 = vmatprep.subr.mxu0 0.0
    %614 = vmatpush1.msra.mxu0 %v556
    %615 = vmatprep.subr.mxu0 0.0
    %616 = vmatpush1.msra.mxu0 %v555
    %617 = vmatprep.subr.mxu0 0.0
    %618 = vmatpush1.msra.mxu0 %v554
    %619 = vmatprep.subr.mxu0 0.0
    %620 = vmatpush1.msra.mxu0 %v553
    %621 = vmatprep.subr.mxu0 0.0
    %622 = vmatpush1.msra.mxu0 %v552
    %623 = vmatprep.subr.mxu0 0.0
    %624 = vmatpush2.msra.mxu0 %v583
    %625 = vmatprep.subr.mxu0 0.0
    %626 = vmatpush2.msra.mxu0 %v582
    %627 = vmatprep.subr.mxu0 0.0
    %628 = vmatpush2.msra.mxu0 %v581
    %629 = vmatprep.subr.mxu0 0.0
    %630 = vmatpush2.msra.mxu0 %v580
    %631 = vmatprep.subr.mxu0 0.0
    %632 = vmatpush2.msra.mxu0 %v579
    %633 = vmatprep.subr.mxu0 0.0
    %634 = vmatpush2.msra.mxu0 %v578
    %635 = vmatprep.subr.mxu0 0.0
    %636 = vmatpush2.msra.mxu0 %v577
    %637 = vmatprep.subr.mxu0 0.0
    %638 = vmatpush2.msra.mxu0 %v576
    %639 = vmatprep.subr.mxu0 0.0
    %640 = vmatpush2.msra.mxu0 %v575
    %641 = vmatprep.subr.mxu0 0.0
    %642 = vmatpush2.msra.mxu0 %v574
    %643 = vmatprep.subr.mxu0 0.0
    %644 = vmatpush2.msra.mxu0 %v573
    %645 = vmatprep.subr.mxu0 0.0
    %646 = vmatpush2.msra.mxu0 %v572
    %647 = vmatprep.subr.mxu0 0.0
    %648 = vmatpush2.msra.mxu0 %v571
    %649 = vmatprep.subr.mxu0 0.0
    %650 = vmatpush2.msra.mxu0 %v570
    %651 = vmatprep.subr.mxu0 0.0
    %652 = vmatpush2.msra.mxu0 %v569
    %653 = vmatprep.subr.mxu0 0.0
    %654 = vmatpush2.msra.mxu0 %v568
    %655 = vmatprep.mubr.f32.mxu0 %v549
    %656 = vmatmul.mubr.f32.gmra.mxu0 %v548
    %v657 = vpop.f32.mrf.mxu0
    %v658 = vadd.f32 %v589, %v657
    %v659 = vpop.f32.mrf.mxu0
    %660 = vmatprep.mubr.f32.mxu0 %v551
    %661 = vmatmul.mubr.f32.gmra.mxu0 %v550
    %v662 = vpop.f32.mrf.mxu0
    %v663 = vadd.f32 %v589, %v662
    %v664 = vpop.f32.mrf.mxu0
    %665 = vdwg.mxu0
    %v666 = vmax.f32 %v658, 0.0
    %v667 = vmax.f32 %v663, 0.0
    %v668 = vld [vmem:[#allocation10] sm:$0xff]
    %v669 = vld [vmem:[#allocation10 + $0x8] sm:$0xff]
    %v670 = vld [vmem:[#allocation10 + $0x10] sm:$0xff]
    %v671 = vld [vmem:[#allocation10 + $0x18] sm:$0xff]
    %v672 = vld [vmem:[#allocation10 + $0x20] sm:$0xff]
    %v673 = vld [vmem:[#allocation10 + $0x28] sm:$0xff]
    %v674 = vld [vmem:[#allocation10 + $0x30] sm:$0xff]
    %v675 = vld [vmem:[#allocation10 + $0x38] sm:$0xff]
    %v676 = vld [vmem:[#allocation10 + $0x40] sm:$0xff]
    %v677 = vld [vmem:[#allocation10 + $0x48] sm:$0xff]
    %v678 = vld [vmem:[#allocation10 + $0x50] sm:$0xff]
    %v679 = vld [vmem:[#allocation10 + $0x58] sm:$0xff]
    %v680 = vld [vmem:[#allocation10 + $0x60] sm:$0xff]
    %v681 = vld [vmem:[#allocation10 + $0x68] sm:$0xff]
    %v682 = vld [vmem:[#allocation10 + $0x70] sm:$0xff]
    %v683 = vld [vmem:[#allocation10 + $0x78] sm:$0xff]
    %v684 = vld [vmem:[%s10] sm:$0x1]
    %v686 = vlaneseq
    %v687 = vshrl.u32 %v686, 7
    %v688 = vsub.s32 0, %v687
    %v689 = vrot.slane %v684, %v688
    %691 = vmatprep.subr.mxu0 0.0
    %692 = vmatpush1.msra.mxu0 %v683
    %693 = vmatprep.subr.mxu0 0.0
    %694 = vmatpush1.msra.mxu0 %v682
    %695 = vmatprep.subr.mxu0 0.0
    %696 = vmatpush1.msra.mxu0 %v681
    %697 = vmatprep.subr.mxu0 0.0
    %698 = vmatpush1.msra.mxu0 %v680
    %699 = vmatprep.subr.mxu0 0.0
    %700 = vmatpush1.msra.mxu0 %v679
    %701 = vmatprep.subr.mxu0 0.0
    %702 = vmatpush1.msra.mxu0 %v678
    %703 = vmatprep.subr.mxu0 0.0
    %704 = vmatpush1.msra.mxu0 %v677
    %705 = vmatprep.subr.mxu0 0.0
    %706 = vmatpush1.msra.mxu0 %v676
    %707 = vmatprep.subr.mxu0 0.0
    %708 = vmatpush1.msra.mxu0 %v675
    %709 = vmatprep.subr.mxu0 0.0
    %710 = vmatpush1.msra.mxu0 %v674
    %711 = vmatprep.subr.mxu0 0.0
    %712 = vmatpush1.msra.mxu0 %v673
    %713 = vmatprep.subr.mxu0 0.0
    %714 = vmatpush1.msra.mxu0 %v672
    %715 = vmatprep.subr.mxu0 0.0
    %716 = vmatpush1.msra.mxu0 %v671
    %717 = vmatprep.subr.mxu0 0.0
    %718 = vmatpush1.msra.mxu0 %v670
    %719 = vmatprep.subr.mxu0 0.0
    %720 = vmatpush1.msra.mxu0 %v669
    %721 = vmatprep.subr.mxu0 0.0
    %722 = vmatpush1.msra.mxu0 %v668
    %723 = vmatprep.subr.mxu0 0.0
    %724 = vmatpush2.msra.mxu0 0.0
    %725 = vmatprep.subr.mxu0 0.0
    %726 = vmatpush2.msra.mxu0 0.0
    %727 = vmatprep.subr.mxu0 0.0
    %728 = vmatpush2.msra.mxu0 0.0
    %729 = vmatprep.subr.mxu0 0.0
    %730 = vmatpush2.msra.mxu0 0.0
    %731 = vmatprep.subr.mxu0 0.0
    %732 = vmatpush2.msra.mxu0 0.0
    %733 = vmatprep.subr.mxu0 0.0
    %734 = vmatpush2.msra.mxu0 0.0
    %735 = vmatprep.subr.mxu0 0.0
    %736 = vmatpush2.msra.mxu0 0.0
    %737 = vmatprep.subr.mxu0 0.0
    %738 = vmatpush2.msra.mxu0 0.0
    %739 = vmatprep.subr.mxu0 0.0
    %740 = vmatpush2.msra.mxu0 0.0
    %741 = vmatprep.subr.mxu0 0.0
    %742 = vmatpush2.msra.mxu0 0.0
    %743 = vmatprep.subr.mxu0 0.0
    %744 = vmatpush2.msra.mxu0 0.0
    %745 = vmatprep.subr.mxu0 0.0
    %746 = vmatpush2.msra.mxu0 0.0
    %747 = vmatprep.subr.mxu0 0.0
    %748 = vmatpush2.msra.mxu0 0.0
    %749 = vmatprep.subr.mxu0 0.0
    %750 = vmatpush2.msra.mxu0 0.0
    %751 = vmatprep.subr.mxu0 0.0
    %752 = vmatpush2.msra.mxu0 0.0
    %753 = vmatprep.subr.mxu0 0.0
    %754 = vmatpush2.msra.mxu0 0.0
    %755 = vmatprep.mubr.f32.mxu0 0.0
    %756 = vmatmul.mubr.f32.gmra.mxu0 %v666
    %v757 = vpop.f32.mrf.mxu0
    %v758 = vadd.f32 %v689, %v757
    %v759 = vpop.f32.mrf.mxu0
    %760 = vmatprep.mubr.f32.mxu0 0.0
    %761 = vmatmul.mubr.f32.gmra.mxu0 %v667
    %v762 = vpop.f32.mrf.mxu0
    %v763 = vadd.f32 %v689, %v762
    %v764 = vpop.f32.mrf.mxu0
    %765 = vdwg.mxu0
    %v766 = vmax.f32 %v758, 0.0
    %v767 = vmax.f32 %v763, 0.0
    %768 = vst [vmem:[%s11] sm:$0xff] %v766
    %769 = vst [vmem:[%s11 + $0x8] sm:$0xff] %v767
    // Predicated region
    $region70: #{_forward_impl.1} parent=1 // pred_check
      _
    $region71: #{_forward_impl.1} parent=1 // pred_check_branch
      %771 = sbr.rel (0) target = $region73
    $region72: #{_forward_impl.1} parent=1 // pred_region
      _
    $region73: #{_forward_impl.1} parent=1 // pred_fallthru
      _
    // Predicated region
    $region74: #{_forward_impl.1} parent=1 // pred_check
      _
    $region75: #{_forward_impl.1} parent=1 // pred_check_branch
      %773 = sbr.rel (0) target = $region77
    $region76: #{_forward_impl.1} parent=1 // pred_region
      _
    $region77: #{_forward_impl.1} parent=1 // pred_fallthru
      _
    %774 = vsyncpa [#allocation3], 1
    %775 = vsyncpa [#allocation5], 1
    %776 = vsyncpa [#allocation8], 1
    %777 = vsyncpa [#allocation11], 1

</llo_original>
